<compile_context>
chip_gen: v7x
topology: tpu7x:2x2x1
jax: 0.10.0
libtpu: 0.0.40
codegen_flags: <defaults>
</compile_context>

<pallas_src>
import functools
import math
from math import sqrt

import jax
import jax.numpy as jnp
from jax.experimental import pallas as pl
from jax.experimental.pallas import tpu as pltpu

LN_EPS = 1e-5  # nn.LayerNorm default.  Must stay > 0: garbage rows in the
               # masked partial last tile can have var == 0 (see kernel).


def _round_up(n, m):
    return (n + m - 1) // m * m


def _device_kind():
    try:
        return jax.devices()[0].device_kind.lower()
    except Exception:
        return ""


def _vmem_cap_bytes():
    """Generation-aware VMEM cap (leave ~1/8 headroom for compiler scratch)."""
    try:
        cap = int(pltpu.get_tpu_info().vmem_capacity_bytes)
    except Exception:
        cap = 64 * 1024 * 1024  # conservative (v7x-sized) default
    return max(cap * 7 // 8, 16 * 1024 * 1024)


def _num_tensorcores():
    # v7x has 2 TensorCores per chip; v5e/v6e have 1.
    return 2 if "v7" in _device_kind() else 1


def _elementwise_dtype():
    # bf16 VALU exists on v6e/v7x; v5e (and unknown chips) stay in f32.
    kind = _device_kind()
    if "v6" in kind or "v7" in kind:
        return jnp.bfloat16
    return jnp.float32


def _resident_spec(shape, single_buffer):
    """BlockSpec for a grid-invariant (resident) block."""
    idx = lambda i: (0, 0)
    if single_buffer:
        try:
            # Constant block index => one buffer is enough (halves weight VMEM).
            return pl.BlockSpec(shape, idx, pipeline_mode=pl.Buffered(1))
        except (TypeError, AttributeError):
            pass
    return pl.BlockSpec(shape, idx)


def _mlp_decoder_kernel(x_ref, g_ref, be_ref, w1_ref, b1_ref, w2_ref, b2_ref,
                        o_ref, *, ew_dtype):
    # x_ref: (TM, dim) tile of input rows; feature block width == true dim,
    # so LayerNorm needs no lane masking.
    x = x_ref[...].astype(jnp.float32)

    # --- LayerNorm (f32 statistics) -------------------------------------
    inv_d = jnp.float32(1.0 / x.shape[-1])
    mean = jnp.sum(x, axis=-1, keepdims=True) * inv_d
    centered = x - mean
    var = jnp.sum(centered * centered, axis=-1, keepdims=True) * inv_d
    # LN_EPS > 0 keeps rsqrt finite for garbage rows of the partial last tile
    # (their output rows are write-masked by Pallas anyway).
    xn = centered * jax.lax.rsqrt(var + LN_EPS)
    xn = xn * g_ref[...].astype(jnp.float32) + be_ref[...].astype(jnp.float32)

    # --- Linear(dim -> mlp_dim): bf16 operands, f32 MXU accumulation -----
    h = jnp.dot(xn.astype(w1_ref.dtype), w1_ref[...],
                preferred_element_type=jnp.float32)
    h = h + b1_ref[...].astype(jnp.float32)

    # --- GELU (exact erf form = nn.GELU() default) -----------------------
    # bf16 on v6e/v7x (bf16 VALU, result feeds a bf16 matmul anyway); f32 on v5e.
    h = h.astype(ew_dtype)
    half = jnp.asarray(0.5, ew_dtype)
    one = jnp.asarray(1.0, ew_dtype)
    inv_sqrt2 = jnp.asarray(1.0 / sqrt(2.0), ew_dtype)
    h = half * h * (one + jax.lax.erf(h * inv_sqrt2))

    # --- Linear(mlp_dim -> out_dim): bf16 operands, f32 accumulation -----
    y = jnp.dot(h.astype(w2_ref.dtype), w2_ref[...],
                preferred_element_type=jnp.float32)
    y = y + b2_ref[...].astype(jnp.float32)

    o_ref[...] = y.astype(o_ref.dtype)


@functools.partial(jax.jit,
                   static_argnames=("tile_rows", "mxu_dtype", "conservative"))
def mlp_decoder(x, gamma, beta, w1, b1, w2, b2, *, tile_rows=512,
                mxu_dtype=jnp.bfloat16, conservative=False):
    """x: (..., dim) -> (..., out_dim), matching MLPDecoder.forward.

    NOTE: the default mxu_dtype=bfloat16 runs both matmuls with bf16 operands
    (f32 accumulation).  Pass mxu_dtype=jnp.float32 if bit-closeness to the
    pure-f32 PyTorch module matters more than MXU throughput.
    """
    dim = x.shape[-1]
    mlp_dim = w1.shape[1]
    out_dim = w2.shape[1]
    lead_shape = x.shape[:-1]
    n_rows = math.prod(lead_shape) if lead_shape else 1

    ew_dtype = jnp.float32 if conservative else _elementwise_dtype()
    single_buffer = not conservative
    n_tc = _num_tensorcores()
    vmem_cap = _vmem_cap_bytes()
    wbytes = jnp.dtype(mxu_dtype).itemsize
    xbytes = jnp.dtype(x.dtype).itemsize

    # Weights/biases stay fully resident in VMEM (single-buffered).
    weight_bytes = ((dim * mlp_dim + mlp_dim * out_dim) * wbytes
                    + (2 * dim + mlp_dim + out_dim) * 4)
    # TODO(synk): add a K/N-tiled fallback (f32 accumulator scratch over
    # mlp_dim/out_dim) once weight_bytes no longer fits resident in VMEM
    # (first hit on v7x's 64 MiB).

    # --- Row tile selection ----------------------------------------------
    # Rough per-row working set: double-buffered in/out tiles + f32/bf16
    # intermediates (xn, h) headroom.
    per_row = (2 * dim * xbytes + 2 * out_dim * xbytes
               + 4 * (2 * dim + 2 * mlp_dim))
    budget = max(vmem_cap // 2 - weight_bytes, 8 * per_row)
    tm = min(tile_rows, max(budget // per_row, 8))
    if n_rows <= 8:
        tm = n_rows                              # block spans all rows
    else:
        tm = max(min(tm, n_rows // 8 * 8) // 8 * 8, 8)
        steps = pl.cdiv(n_rows, tm)
        # v7x: two TensorCores -> prefer an even number of parallel grid steps.
        if n_tc >= 2 and steps % 2 == 1:
            cand = _round_up(pl.cdiv(n_rows, steps + 1), 8)
            if 8 <= cand <= n_rows // 8 * 8 and pl.cdiv(n_rows, cand) % 2 == 0:
                tm = cand
    grid = (pl.cdiv(n_rows, tm),)

    # Free (metadata-only) reshapes; no padding, no post-slice.
    x2 = x.reshape(n_rows, dim)
    gamma2 = gamma.astype(jnp.float32).reshape(1, dim)
    beta2 = beta.astype(jnp.float32).reshape(1, dim)
    w1c = w1.astype(mxu_dtype)
    b1c = b1.astype(jnp.float32).reshape(1, mlp_dim)
    w2c = w2.astype(mxu_dtype)
    b2c = b2.astype(jnp.float32).reshape(1, out_dim)

    # Explicit VMEM budget consistent with single-buffered resident weights.
    vmem_est = (
        2 * tm * dim * xbytes                 # input tile (double buffered)
        + 2 * tm * out_dim * xbytes           # output tile (double buffered)
        + (1 if single_buffer else 2) * weight_bytes
        + 4 * tm * (2 * dim + 2 * mlp_dim)    # intermediates headroom
    )
    vmem_limit = int(min(max(vmem_est, 16 * 1024 * 1024), vmem_cap))

    kernel = functools.partial(_mlp_decoder_kernel, ew_dtype=ew_dtype)

    out2 = pl.pallas_call(
        kernel,
        out_shape=jax.ShapeDtypeStruct((n_rows, out_dim), x.dtype),
        grid_spec=pltpu.PrefetchScalarGridSpec(
            num_scalar_prefetch=0,
            grid=grid,
            in_specs=[
                pl.BlockSpec((tm, dim), lambda i: (i, 0)),          # x row tile
                _resident_spec((1, dim), single_buffer),            # gamma
                _resident_spec((1, dim), single_buffer),            # beta
                _resident_spec((dim, mlp_dim), single_buffer),      # W1
                _resident_spec((1, mlp_dim), single_buffer),        # b1
                _resident_spec((mlp_dim, out_dim), single_buffer),  # W2
                _resident_spec((1, out_dim), single_buffer),        # b2
            ],
            out_specs=pl.BlockSpec((tm, out_dim), lambda i: (i, 0)),
        ),
        compiler_params=pltpu.CompilerParams(
            dimension_semantics=("parallel",),
            vmem_limit_bytes=vmem_limit),
    )(x2, gamma2, beta2, w1c, b1c, w2c, b2c)

    return out2.reshape(*lead_shape, out_dim)


def init_params(key, dim, mlp_dim, out_dim, dtype=jnp.float32):
    """Deterministic synthetic parameters (shapes match the PyTorch module)."""
    k1, k2, k3, k4 = jax.random.split(key, 4)
    gamma = jnp.ones((dim,), dtype)
    beta = jnp.zeros((dim,), dtype)
    bound1 = 1.0 / sqrt(dim)
    w1 = jax.random.uniform(k1, (dim, mlp_dim), dtype, -bound1, bound1)
    b1 = jax.random.uniform(k2, (mlp_dim,), dtype, -bound1, bound1)
    bound2 = 1.0 / sqrt(mlp_dim)
    w2 = jax.random.uniform(k3, (mlp_dim, out_dim), dtype, -bound2, bound2)
    b2 = jax.random.uniform(k4, (out_dim,), dtype, -bound2, bound2)
    return gamma, beta, w1, b1, w2, b2


def _reference_f32(x, gamma, beta, w1, b1, w2, b2):
    """Pure f32 reference matching the PyTorch module semantics."""
    mean = jnp.mean(x, axis=-1, keepdims=True)
    var = jnp.mean((x - mean) ** 2, axis=-1, keepdims=True)
    xn = (x - mean) * jax.lax.rsqrt(var + LN_EPS) * gamma + beta
    h = xn @ w1 + b1
    h = 0.5 * h * (1.0 + jax.lax.erf(h / sqrt(2.0)))
    return h @ w2 + b2


def _reference_mxu(x, gamma, beta, w1, b1, w2, b2,
                   mxu_dtype=jnp.bfloat16, ew_dtype=jnp.float32):
    """Reference mirroring the kernel numerics (bf16 matmuls, ew_dtype GELU)."""
    mean = jnp.mean(x, axis=-1, keepdims=True)
    var = jnp.mean((x - mean) ** 2, axis=-1, keepdims=True)
    xn = (x - mean) * jax.lax.rsqrt(var + LN_EPS) * gamma + beta
    h = jnp.dot(xn.astype(mxu_dtype), w1.astype(mxu_dtype),
                preferred_element_type=jnp.float32) + b1
    h = h.astype(ew_dtype)
    h = (jnp.asarray(0.5, ew_dtype) * h
         * (jnp.asarray(1.0, ew_dtype)
            + jax.lax.erf(h * jnp.asarray(1.0 / sqrt(2.0), ew_dtype))))
    return jnp.dot(h.astype(mxu_dtype), w2.astype(mxu_dtype),
                   preferred_element_type=jnp.float32) + b2


if __name__ == "__main__":
    key = jax.random.PRNGKey(0)
    kx, kp = jax.random.split(key)

    batch, seq, dim, mlp_dim, out_dim = 2, 8, 32, 64, 16
    x = jax.random.normal(kx, (batch, seq, dim), jnp.float32)
    params = init_params(kp, dim, mlp_dim, out_dim)

    used_conservative = False
    try:
        out = jax.block_until_ready(mlp_decoder(x, *params))
    except Exception:
        # Portable fallback (double-buffered specs, f32 elementwise) in case a
        # generation-specific tuning path fails to lower on this TPU.
        used_conservative = True
        out = jax.block_until_ready(mlp_decoder(x, *params, conservative=True))
    assert out.shape == (batch, seq, out_dim)

    # Tight check against a reference mirroring the kernel's numerics.
    ew = jnp.float32 if used_conservative else _elementwise_dtype()
    ref_mxu = _reference_mxu(x, *params, ew_dtype=ew)
    assert jnp.allclose(out, ref_mxu, atol=1e-2, rtol=1e-2), (
        float(jnp.max(jnp.abs(out - ref_mxu))))
    # Loose check against the pure-f32 module semantics (bf16 MXU rounding).
    ref_f32 = _reference_f32(x, *params)
    assert jnp.allclose(out, ref_f32, atol=5e-2, rtol=5e-2), (
        float(jnp.max(jnp.abs(out - ref_f32))))

    print("KERNEL_OK")
</pallas_src>

<mosaic_0001>
module attributes {stable_mosaic.version = 11 : i64} {
  func.func @_mlp_decoder_kernel(%arg0: i32, %arg1: memref<16x32xf32, #tpu.memory_space<vmem>>, %arg2: memref<1x32xf32, #tpu.memory_space<vmem>>, %arg3: memref<1x32xf32, #tpu.memory_space<vmem>>, %arg4: memref<32x64xbf16, #tpu.memory_space<vmem>>, %arg5: memref<1x64xf32, #tpu.memory_space<vmem>>, %arg6: memref<64x16xbf16, #tpu.memory_space<vmem>>, %arg7: memref<1x16xf32, #tpu.memory_space<vmem>>, %arg8: memref<16x16xf32, #tpu.memory_space<vmem>>) attributes {dimension_semantics = [#tpu.dimension_semantics<parallel>], iteration_bounds = array<i64: 1>, scalar_prefetch = 0 : i64, scratch_operands = 0 : i64, tpu.core_type = #tpu.core_type<tc>, window_params = [{transform_indices = @transform_0, window_bounds = array<i64: 16, 32>}, {pipeline_mode = #tpu.pipeline_mode<synchronous>, transform_indices = @transform_1, window_bounds = array<i64: 1, 32>}, {pipeline_mode = #tpu.pipeline_mode<synchronous>, transform_indices = @transform_2, window_bounds = array<i64: 1, 32>}, {pipeline_mode = #tpu.pipeline_mode<synchronous>, transform_indices = @transform_3, window_bounds = array<i64: 32, 64>}, {pipeline_mode = #tpu.pipeline_mode<synchronous>, transform_indices = @transform_4, window_bounds = array<i64: 1, 64>}, {pipeline_mode = #tpu.pipeline_mode<synchronous>, transform_indices = @transform_5, window_bounds = array<i64: 64, 16>}, {pipeline_mode = #tpu.pipeline_mode<synchronous>, transform_indices = @transform_6, window_bounds = array<i64: 1, 16>}, {transform_indices = @transform_7, window_bounds = array<i64: 16, 16>}]} {
    %c0 = arith.constant 0 : index
    %c0_0 = arith.constant 0 : index
    %0 = vector.load %arg1[%c0, %c0_0] : memref<16x32xf32, #tpu.memory_space<vmem>>, vector<16x32xf32>
    %cst = arith.constant dense<0.000000e+00> : vector<16xf32>
    %1 = vector.multi_reduction <add>, %0, %cst [1] : vector<16x32xf32> to vector<16xf32>
    %2 = vector.shape_cast %1 : vector<16xf32> to vector<16x1xf32>
    %cst_1 = arith.constant 3.125000e-02 : f32
    %3 = vector.broadcast %cst_1 : f32 to vector<16x1xf32>
    %4 = arith.mulf %2, %3 : vector<16x1xf32>
    %5 = vector.broadcast %4 : vector<16x1xf32> to vector<16x32xf32>
    %6 = arith.subf %0, %5 : vector<16x32xf32>
    %7 = arith.mulf %6, %6 : vector<16x32xf32>
    %cst_2 = arith.constant dense<0.000000e+00> : vector<16xf32>
    %8 = vector.multi_reduction <add>, %7, %cst_2 [1] : vector<16x32xf32> to vector<16xf32>
    %9 = vector.shape_cast %8 : vector<16xf32> to vector<16x1xf32>
    %cst_3 = arith.constant 3.125000e-02 : f32
    %10 = vector.broadcast %cst_3 : f32 to vector<16x1xf32>
    %11 = arith.mulf %9, %10 : vector<16x1xf32>
    %cst_4 = arith.constant 9.99999974E-6 : f32
    %12 = vector.broadcast %cst_4 : f32 to vector<16x1xf32>
    %13 = arith.addf %11, %12 : vector<16x1xf32>
    %14 = math.rsqrt %13 : vector<16x1xf32>
    %15 = vector.broadcast %14 : vector<16x1xf32> to vector<16x32xf32>
    %16 = arith.mulf %6, %15 : vector<16x32xf32>
    %c0_5 = arith.constant 0 : index
    %c0_6 = arith.constant 0 : index
    %17 = vector.load %arg2[%c0_5, %c0_6] : memref<1x32xf32, #tpu.memory_space<vmem>>, vector<1x32xf32>
    %18 = vector.broadcast %17 : vector<1x32xf32> to vector<16x32xf32>
    %19 = arith.mulf %16, %18 : vector<16x32xf32>
    %c0_7 = arith.constant 0 : index
    %c0_8 = arith.constant 0 : index
    %20 = vector.load %arg3[%c0_7, %c0_8] : memref<1x32xf32, #tpu.memory_space<vmem>>, vector<1x32xf32>
    %21 = vector.broadcast %20 : vector<1x32xf32> to vector<16x32xf32>
    %22 = arith.addf %19, %21 : vector<16x32xf32>
    %23 = arith.truncf %22 : vector<16x32xf32> to vector<16x32xbf16>
    %c0_9 = arith.constant 0 : index
    %c0_10 = arith.constant 0 : index
    %24 = vector.load %arg4[%c0_9, %c0_10] : memref<32x64xbf16, #tpu.memory_space<vmem>>, vector<32x64xbf16>
    %cst_11 = arith.constant dense<0.000000e+00> : vector<16x64xf32>
    %25 = tpu.matmul %23, %24, %cst_11 {dimension_numbers = #tpu.dot_dimension_numbers<[1], [0], [0], [1], [0, 0, 1, 1], [], []>} : vector<16x32xbf16>, vector<32x64xbf16>, vector<16x64xf32> -> vector<16x64xf32>
    %c0_12 = arith.constant 0 : index
    %c0_13 = arith.constant 0 : index
    %26 = vector.load %arg5[%c0_12, %c0_13] : memref<1x64xf32, #tpu.memory_space<vmem>>, vector<1x64xf32>
    %27 = vector.broadcast %26 : vector<1x64xf32> to vector<16x64xf32>
    %28 = arith.addf %25, %27 : vector<16x64xf32>
    %cst_14 = arith.constant 5.000000e-01 : f32
    %29 = vector.broadcast %cst_14 : f32 to vector<16x64xf32>
    %30 = arith.mulf %29, %28 : vector<16x64xf32>
    %cst_15 = arith.constant 0.707106769 : f32
    %31 = vector.broadcast %cst_15 : f32 to vector<16x64xf32>
    %32 = arith.mulf %28, %31 : vector<16x64xf32>
    %33 = math.erf %32 : vector<16x64xf32>
    %cst_16 = arith.constant 1.000000e+00 : f32
    %34 = vector.broadcast %cst_16 : f32 to vector<16x64xf32>
    %35 = arith.addf %34, %33 : vector<16x64xf32>
    %36 = arith.mulf %30, %35 : vector<16x64xf32>
    %37 = arith.truncf %36 : vector<16x64xf32> to vector<16x64xbf16>
    %c0_17 = arith.constant 0 : index
    %c0_18 = arith.constant 0 : index
    %38 = vector.load %arg6[%c0_17, %c0_18] : memref<64x16xbf16, #tpu.memory_space<vmem>>, vector<64x16xbf16>
    %cst_19 = arith.constant dense<0.000000e+00> : vector<16x16xf32>
    %39 = tpu.matmul %37, %38, %cst_19 {dimension_numbers = #tpu.dot_dimension_numbers<[1], [0], [0], [1], [0, 0, 1, 1], [], []>} : vector<16x64xbf16>, vector<64x16xbf16>, vector<16x16xf32> -> vector<16x16xf32>
    %c0_20 = arith.constant 0 : index
    %c0_21 = arith.constant 0 : index
    %40 = vector.load %arg7[%c0_20, %c0_21] : memref<1x16xf32, #tpu.memory_space<vmem>>, vector<1x16xf32>
    %41 = vector.broadcast %40 : vector<1x16xf32> to vector<16x16xf32>
    %42 = arith.addf %39, %41 : vector<16x16xf32>
    %c0_22 = arith.constant 0 : index
    %c0_23 = arith.constant 0 : index
    %43 = vector.load %arg8[%c0_22, %c0_23] : memref<16x16xf32, #tpu.memory_space<vmem>>, vector<16x16xf32>
    tpu.vector_store %arg8[%c0_22, %c0_23], %42 {strides = array<i32>} : memref<16x16xf32, #tpu.memory_space<vmem>>, vector<16x16xf32>,
    return
  }
  func.func @transform_0(%arg0: i32) -> (i32, i32) {
    %c0_i32 = arith.constant 0 : i32
    %c0_i32_0 = arith.constant 0 : i32
    return %arg0, %c0_i32 : i32, i32
  }
  func.func @transform_1(%arg0: i32) -> (i32, i32) {
    %c0_i32 = arith.constant 0 : i32
    %c0_i32_0 = arith.constant 0 : i32
    %c0_i32_1 = arith.constant 0 : i32
    return %c0_i32, %c0_i32_0 : i32, i32
  }
  func.func @transform_2(%arg0: i32) -> (i32, i32) {
    %c0_i32 = arith.constant 0 : i32
    %c0_i32_0 = arith.constant 0 : i32
    %c0_i32_1 = arith.constant 0 : i32
    return %c0_i32, %c0_i32_0 : i32, i32
  }
  func.func @transform_3(%arg0: i32) -> (i32, i32) {
    %c0_i32 = arith.constant 0 : i32
    %c0_i32_0 = arith.constant 0 : i32
    %c0_i32_1 = arith.constant 0 : i32
    return %c0_i32, %c0_i32_0 : i32, i32
  }
  func.func @transform_4(%arg0: i32) -> (i32, i32) {
    %c0_i32 = arith.constant 0 : i32
    %c0_i32_0 = arith.constant 0 : i32
    %c0_i32_1 = arith.constant 0 : i32
    return %c0_i32, %c0_i32_0 : i32, i32
  }
  func.func @transform_5(%arg0: i32) -> (i32, i32) {
    %c0_i32 = arith.constant 0 : i32
    %c0_i32_0 = arith.constant 0 : i32
    %c0_i32_1 = arith.constant 0 : i32
    return %c0_i32, %c0_i32_0 : i32, i32
  }
  func.func @transform_6(%arg0: i32) -> (i32, i32) {
    %c0_i32 = arith.constant 0 : i32
    %c0_i32_0 = arith.constant 0 : i32
    %c0_i32_1 = arith.constant 0 : i32
    return %c0_i32, %c0_i32_0 : i32, i32
  }
  func.func @transform_7(%arg0: i32) -> (i32, i32) {
    %c0_i32 = arith.constant 0 : i32
    %c0_i32_0 = arith.constant 0 : i32
    return %arg0, %c0_i32 : i32, i32
  }
}

module attributes {stable_mosaic.version = 11 : i64} {
  func.func @_mlp_decoder_kernel(%arg0: i32, %arg1: memref<16x32xf32, #tpu.memory_space<vmem>>, %arg2: memref<1x32xf32, #tpu.memory_space<vmem>>, %arg3: memref<1x32xf32, #tpu.memory_space<vmem>>, %arg4: memref<32x64xbf16, #tpu.memory_space<vmem>>, %arg5: memref<1x64xf32, #tpu.memory_space<vmem>>, %arg6: memref<64x16xbf16, #tpu.memory_space<vmem>>, %arg7: memref<1x16xf32, #tpu.memory_space<vmem>>, %arg8: memref<16x16xf32, #tpu.memory_space<vmem>>) attributes {dimension_semantics = [#tpu.dimension_semantics<parallel>], iteration_bounds = array<i64: 1>, scalar_prefetch = 0 : i64, scratch_operands = 0 : i64, tpu.core_type = #tpu.core_type<tc>, window_params = [{transform_indices = @transform_0, window_bounds = array<i64: 16, 32>}, {pipeline_mode = #tpu.pipeline_mode<synchronous>, transform_indices = @transform_1, window_bounds = array<i64: 1, 32>}, {pipeline_mode = #tpu.pipeline_mode<synchronous>, transform_indices = @transform_2, window_bounds = array<i64: 1, 32>}, {pipeline_mode = #tpu.pipeline_mode<synchronous>, transform_indices = @transform_3, window_bounds = array<i64: 32, 64>}, {pipeline_mode = #tpu.pipeline_mode<synchronous>, transform_indices = @transform_4, window_bounds = array<i64: 1, 64>}, {pipeline_mode = #tpu.pipeline_mode<synchronous>, transform_indices = @transform_5, window_bounds = array<i64: 64, 16>}, {pipeline_mode = #tpu.pipeline_mode<synchronous>, transform_indices = @transform_6, window_bounds = array<i64: 1, 16>}, {transform_indices = @transform_7, window_bounds = array<i64: 16, 16>}]} {
    %c0 = arith.constant 0 : index
    %c0_0 = arith.constant 0 : index
    %0 = vector.load %arg1[%c0, %c0_0] : memref<16x32xf32, #tpu.memory_space<vmem>>, vector<16x32xf32>
    %cst = arith.constant dense<0.000000e+00> : vector<16xf32>
    %1 = vector.multi_reduction <add>, %0, %cst [1] : vector<16x32xf32> to vector<16xf32>
    %2 = vector.shape_cast %1 : vector<16xf32> to vector<16x1xf32>
    %cst_1 = arith.constant 3.125000e-02 : f32
    %3 = vector.broadcast %cst_1 : f32 to vector<16x1xf32>
    %4 = arith.mulf %2, %3 : vector<16x1xf32>
    %5 = vector.broadcast %4 : vector<16x1xf32> to vector<16x32xf32>
    %6 = arith.subf %0, %5 : vector<16x32xf32>
    %7 = arith.mulf %6, %6 : vector<16x32xf32>
    %cst_2 = arith.constant dense<0.000000e+00> : vector<16xf32>
    %8 = vector.multi_reduction <add>, %7, %cst_2 [1] : vector<16x32xf32> to vector<16xf32>
    %9 = vector.shape_cast %8 : vector<16xf32> to vector<16x1xf32>
    %cst_3 = arith.constant 3.125000e-02 : f32
    %10 = vector.broadcast %cst_3 : f32 to vector<16x1xf32>
    %11 = arith.mulf %9, %10 : vector<16x1xf32>
    %cst_4 = arith.constant 9.99999974E-6 : f32
    %12 = vector.broadcast %cst_4 : f32 to vector<16x1xf32>
    %13 = arith.addf %11, %12 : vector<16x1xf32>
    %14 = math.rsqrt %13 : vector<16x1xf32>
    %15 = vector.broadcast %14 : vector<16x1xf32> to vector<16x32xf32>
    %16 = arith.mulf %6, %15 : vector<16x32xf32>
    %c0_5 = arith.constant 0 : index
    %c0_6 = arith.constant 0 : index
    %17 = vector.load %arg2[%c0_5, %c0_6] : memref<1x32xf32, #tpu.memory_space<vmem>>, vector<1x32xf32>
    %18 = vector.broadcast %17 : vector<1x32xf32> to vector<16x32xf32>
    %19 = arith.mulf %16, %18 : vector<16x32xf32>
    %c0_7 = arith.constant 0 : index
    %c0_8 = arith.constant 0 : index
    %20 = vector.load %arg3[%c0_7, %c0_8] : memref<1x32xf32, #tpu.memory_space<vmem>>, vector<1x32xf32>
    %21 = vector.broadcast %20 : vector<1x32xf32> to vector<16x32xf32>
    %22 = arith.addf %19, %21 : vector<16x32xf32>
    %23 = arith.truncf %22 : vector<16x32xf32> to vector<16x32xbf16>
    %c0_9 = arith.constant 0 : index
    %c0_10 = arith.constant 0 : index
    %24 = vector.load %arg4[%c0_9, %c0_10] : memref<32x64xbf16, #tpu.memory_space<vmem>>, vector<32x64xbf16>
    %cst_11 = arith.constant dense<0.000000e+00> : vector<16x64xf32>
    %25 = tpu.matmul %23, %24, %cst_11 {dimension_numbers = #tpu.dot_dimension_numbers<[1], [0], [0], [1], [0, 0, 1, 1], [], []>} : vector<16x32xbf16>, vector<32x64xbf16>, vector<16x64xf32> -> vector<16x64xf32>
    %c0_12 = arith.constant 0 : index
    %c0_13 = arith.constant 0 : index
    %26 = vector.load %arg5[%c0_12, %c0_13] : memref<1x64xf32, #tpu.memory_space<vmem>>, vector<1x64xf32>
    %27 = vector.broadcast %26 : vector<1x64xf32> to vector<16x64xf32>
    %28 = arith.addf %25, %27 : vector<16x64xf32>
    %cst_14 = arith.constant 5.000000e-01 : f32
    %29 = vector.broadcast %cst_14 : f32 to vector<16x64xf32>
    %30 = arith.mulf %29, %28 : vector<16x64xf32>
    %cst_15 = arith.constant 0.707106769 : f32
    %31 = vector.broadcast %cst_15 : f32 to vector<16x64xf32>
    %32 = arith.mulf %28, %31 : vector<16x64xf32>
    %33 = math.erf %32 : vector<16x64xf32>
    %cst_16 = arith.constant 1.000000e+00 : f32
    %34 = vector.broadcast %cst_16 : f32 to vector<16x64xf32>
    %35 = arith.addf %34, %33 : vector<16x64xf32>
    %36 = arith.mulf %30, %35 : vector<16x64xf32>
    %37 = arith.truncf %36 : vector<16x64xf32> to vector<16x64xbf16>
    %c0_17 = arith.constant 0 : index
    %c0_18 = arith.constant 0 : index
    %38 = vector.load %arg6[%c0_17, %c0_18] : memref<64x16xbf16, #tpu.memory_space<vmem>>, vector<64x16xbf16>
    %cst_19 = arith.constant dense<0.000000e+00> : vector<16x16xf32>
    %39 = tpu.matmul %37, %38, %cst_19 {dimension_numbers = #tpu.dot_dimension_numbers<[1], [0], [0], [1], [0, 0, 1, 1], [], []>} : vector<16x64xbf16>, vector<64x16xbf16>, vector<16x16xf32> -> vector<16x16xf32>
    %c0_20 = arith.constant 0 : index
    %c0_21 = arith.constant 0 : index
    %40 = vector.load %arg7[%c0_20, %c0_21] : memref<1x16xf32, #tpu.memory_space<vmem>>, vector<1x16xf32>
    %41 = vector.broadcast %40 : vector<1x16xf32> to vector<16x16xf32>
    %42 = arith.addf %39, %41 : vector<16x16xf32>
    %c0_22 = arith.constant 0 : index
    %c0_23 = arith.constant 0 : index
    %43 = vector.load %arg8[%c0_22, %c0_23] : memref<16x16xf32, #tpu.memory_space<vmem>>, vector<16x16xf32>
    tpu.vector_store %arg8[%c0_22, %c0_23], %42 {strides = array<i32>} : memref<16x16xf32, #tpu.memory_space<vmem>>, vector<16x16xf32>,
    return
  }
  func.func @transform_0(%arg0: i32) -> (i32, i32) {
    %c0_i32 = arith.constant 0 : i32
    %c0_i32_0 = arith.constant 0 : i32
    return %arg0, %c0_i32 : i32, i32
  }
  func.func @transform_1(%arg0: i32) -> (i32, i32) {
    %c0_i32 = arith.constant 0 : i32
    %c0_i32_0 = arith.constant 0 : i32
    %c0_i32_1 = arith.constant 0 : i32
    return %c0_i32, %c0_i32_0 : i32, i32
  }
  func.func @transform_2(%arg0: i32) -> (i32, i32) {
    %c0_i32 = arith.constant 0 : i32
    %c0_i32_0 = arith.constant 0 : i32
    %c0_i32_1 = arith.constant 0 : i32
    return %c0_i32, %c0_i32_0 : i32, i32
  }
  func.func @transform_3(%arg0: i32) -> (i32, i32) {
    %c0_i32 = arith.constant 0 : i32
    %c0_i32_0 = arith.constant 0 : i32
    %c0_i32_1 = arith.constant 0 : i32
    return %c0_i32, %c0_i32_0 : i32, i32
  }
  func.func @transform_4(%arg0: i32) -> (i32, i32) {
    %c0_i32 = arith.constant 0 : i32
    %c0_i32_0 = arith.constant 0 : i32
    %c0_i32_1 = arith.constant 0 : i32
    return %c0_i32, %c0_i32_0 : i32, i32
  }
  func.func @transform_5(%arg0: i32) -> (i32, i32) {
    %c0_i32 = arith.constant 0 : i32
    %c0_i32_0 = arith.constant 0 : i32
    %c0_i32_1 = arith.constant 0 : i32
    return %c0_i32, %c0_i32_0 : i32, i32
  }
  func.func @transform_6(%arg0: i32) -> (i32, i32) {
    %c0_i32 = arith.constant 0 : i32
    %c0_i32_0 = arith.constant 0 : i32
    %c0_i32_1 = arith.constant 0 : i32
    return %c0_i32, %c0_i32_0 : i32, i32
  }
  func.func @transform_7(%arg0: i32) -> (i32, i32) {
    %c0_i32 = arith.constant 0 : i32
    %c0_i32_0 = arith.constant 0 : i32
    return %arg0, %c0_i32 : i32, i32
  }
}

</mosaic_0001>

<llo_original>
// kernel: mlp_decoder.1
$region0: #{mlp_decoder.1}
  #allocation0 [shape = 'u32[]', space=smem, size = 0x4, offset = 0x4, fixed_abs, tag = 'smem constant byte address 0x4 - core index']
  #allocation1 [shape = 'u32[144,128]{1,0:T(1,128)}', space=vmem, size = 0x12000, scoped, tag = 'internal scratch']
  %s0 = inlined_call_operand.vmem [shape: f32[16,32], index: 0, kind: input, shape index: {}]
  %s1 = inlined_call_operand.vmem [shape: f32[1,32], index: 1, kind: input, shape index: {}]
  %s2 = inlined_call_operand.vmem [shape: f32[1,32], index: 2, kind: input, shape index: {}]
  %s3 = inlined_call_operand.vmem [shape: bf16[32,64], index: 3, kind: input, shape index: {}]
  %s4 = inlined_call_operand.vmem [shape: f32[1,64], index: 4, kind: input, shape index: {}]
  %s5 = inlined_call_operand.vmem [shape: bf16[64,16], index: 5, kind: input, shape index: {}]
  %s6 = inlined_call_operand.vmem [shape: f32[1,16], index: 6, kind: input, shape index: {}]
  %s7 = inlined_call_operand.hbm [shape: f32[16,16], index: 7, kind: output, shape index: {}]
  %s8 = sld [smem:[#allocation0]]
  $region38: #{mlp_decoder.1} parent=0
    _
  %s10 = ssub.s32 1, %s8
  %s11 = scalar_select 0, %s10, %s8
  $region1: #{mlp_decoder.1} parent=0
    #allocation2 [shape = 'u8[8192]{0}', space=vmem, size = 0x2000, scoped, tag = 'output window, operand 0, single buffered']
    #allocation3 [shape = 's32[1]{0}', space=sflag, size = 0x4, scoped, tag = 'scoped memory for mlp_decoder.1']
    %12 = vsyncpa [#allocation3], 0
    // Predicated region
    $region2: #{mlp_decoder.1} parent=1 // pred_check
      _
    $region3: #{mlp_decoder.1} parent=1 // pred_check_branch
      %14 = sbr.rel (0) target = $region5
    $region4: #{mlp_decoder.1} parent=1 // pred_region
      _
    $region5: #{mlp_decoder.1} parent=1 // pred_fallthru
      _
    // Predicated region
    $region6: #{mlp_decoder.1} parent=1 // pred_check
      _
    $region7: #{mlp_decoder.1} parent=1 // pred_check_branch
      %16 = sbr.rel (0) target = $region9
    $region8: #{mlp_decoder.1} parent=1 // pred_region
      _
    $region9: #{mlp_decoder.1} parent=1 // pred_fallthru
      _
    // Predicated region
    $region10: #{mlp_decoder.1} parent=1 // pred_check
      _
    $region11: #{mlp_decoder.1} parent=1 // pred_check_branch
      %18 = sbr.rel (0) target = $region13
    $region12: #{mlp_decoder.1} parent=1 // pred_region
      _
    $region13: #{mlp_decoder.1} parent=1 // pred_fallthru
      _
    // Predicated region
    $region14: #{mlp_decoder.1} parent=1 // pred_check
      _
    $region15: #{mlp_decoder.1} parent=1 // pred_check_branch
      %20 = sbr.rel (0) target = $region17
    $region16: #{mlp_decoder.1} parent=1 // pred_region
      _
    $region17: #{mlp_decoder.1} parent=1 // pred_fallthru
      _
    // Predicated region
    $region18: #{mlp_decoder.1} parent=1 // pred_check
      _
    $region19: #{mlp_decoder.1} parent=1 // pred_check_branch
      %22 = sbr.rel (0) target = $region21
    $region20: #{mlp_decoder.1} parent=1 // pred_region
      _
    $region21: #{mlp_decoder.1} parent=1 // pred_fallthru
      _
    // Predicated region
    $region22: #{mlp_decoder.1} parent=1 // pred_check
      _
    $region23: #{mlp_decoder.1} parent=1 // pred_check_branch
      %24 = sbr.rel (0) target = $region25
    $region24: #{mlp_decoder.1} parent=1 // pred_region
      _
    $region25: #{mlp_decoder.1} parent=1 // pred_fallthru
      _
    // Predicated region
    $region26: #{mlp_decoder.1} parent=1 // pred_check
      _
    $region27: #{mlp_decoder.1} parent=1 // pred_check_branch
      %26 = sbr.rel (0) target = $region29
    $region28: #{mlp_decoder.1} parent=1 // pred_region
      _
    $region29: #{mlp_decoder.1} parent=1 // pred_fallthru
      _
    %v28 = vld [vmem:[%s0] sm:$0xff]
    %v29 = vld [vmem:[%s0 + $0x8] sm:$0xff]
    %vm30 = vcmask 261120
    %v31 = vsel %vm30, %v28, 0.0
    %32 = vadd.xlane.f32.xlu0 %v31
    %v33 = vpop.xlane.xlu0 %32
    %v34 = vsel %vm30, %v29, 0.0
    %35 = vadd.xlane.f32.xlu0 %v34
    %v36 = vpop.xlane.xlu0 %35
    %v37 = vmul.f32 %v33, 0.03125
    %v38 = vmul.f32 %v36, 0.03125
    %v39 = vsub.f32 %v28, %v37
    %v40 = vsub.f32 %v29, %v38
    %v41 = vmul.f32 %v39, %v39
    %v42 = vmul.f32 %v40, %v40
    %v43 = vsel %vm30, %v41, 0.0
    %44 = vadd.xlane.f32.xlu0 %v43
    %v45 = vpop.xlane.xlu0 %44
    %v46 = vsel %vm30, %v42, 0.0
    %47 = vadd.xlane.f32.xlu0 %v46
    %v48 = vpop.xlane.xlu0 %47
    %v49 = vmul.f32 %v45, 0.03125
    %v50 = vmul.f32 %v48, 0.03125
    %v51 = vadd.f32 %v49, 1e-05
    %v52 = vadd.f32 %v50, 1e-05
    %v53 = vrsqrt.pop %v51
    %v54 = vrsqrt.pop %v52
    %v55 = vmul.f32 %v39, %v53
    %v56 = vmul.f32 %v40, %v54
    %v57 = vld [vmem:[%s1] sm:$0x1]
    %v59 = vlaneseq
    %v60 = vshrl.u32 %v59, 7
    %v61 = vsub.s32 0, %v60
    %v62 = vrot.slane %v57, %v61
    %v64 = vmul.f32 %v55, %v62
    %v65 = vmul.f32 %v56, %v62
    %v66 = vld [vmem:[%s2] sm:$0x1]
    %v68 = vlaneseq
    %v69 = vshrl.u32 %v68, 7
    %v70 = vsub.s32 0, %v69
    %v71 = vrot.slane %v66, %v70
    %v73 = vadd.f32 %v64, %v71
    %v74 = vadd.f32 %v65, %v71
    %v75 = vpack.c.bf16 %v74, %v73
    %v76 = vld [vmem:[%s3] sm:$0xf]
    %v77 = vld [vmem:[%s3 + $0x4] sm:$0xf]
    %v78 = vld [vmem:[%s3 + $0x8] sm:$0xf]
    %v79 = vld [vmem:[%s3 + $0xc] sm:$0xf]
    %v80 = vld [vmem:[%s4] sm:$0x1]
    %v82 = vlaneseq
    %v83 = vshrl.u32 %v82, 7
    %v84 = vsub.s32 0, %v83
    %v85 = vrot.slane %v80, %v84
    %v91 = vunpack.c.l.b16 %v76
    %v92 = vunpack.c.l.b16 %v77
    %v93 = vunpack.c.l.b16 %v78
    %v94 = vunpack.c.l.b16 %v79
    %v95 = vpack.c.b16 %v92, %v91
    %v96 = vpack.c.b16 %v94, %v93
    %v100 = vsel %vm30, %v75, 0
    %102 = vmatprep.subr.bf16.mxu0 0
    %103 = vmatpush1.bf16.msra.mxu0 %v95
    %104 = vmatprep.subr.bf16.mxu0 0
    %105 = vmatpush1.bf16.msra.mxu0 %v96
    %106 = vmatprep.subr.bf16.mxu0 0
    %107 = vmatpush1.bf16.msra.mxu0 0
    %108 = vmatprep.subr.bf16.mxu0 0
    %109 = vmatpush1.bf16.msra.mxu0 0
    %110 = vmatprep.subr.bf16.mxu0 0
    %111 = vmatpush1.bf16.msra.mxu0 0
    %112 = vmatprep.subr.bf16.mxu0 0
    %113 = vmatpush1.bf16.msra.mxu0 0
    %114 = vmatprep.subr.bf16.mxu0 0
    %115 = vmatpush1.bf16.msra.mxu0 0
    %116 = vmatprep.subr.bf16.mxu0 0
    %117 = vmatpush1.bf16.msra.mxu0 0
    %118 = vmatprep.subr.bf16.mxu0 0
    %119 = vmatpush1.bf16.msra.mxu0 0
    %120 = vmatprep.subr.bf16.mxu0 0
    %121 = vmatpush1.bf16.msra.mxu0 0
    %122 = vmatprep.subr.bf16.mxu0 0
    %123 = vmatpush1.bf16.msra.mxu0 0
    %124 = vmatprep.subr.bf16.mxu0 0
    %125 = vmatpush1.bf16.msra.mxu0 0
    %126 = vmatprep.subr.bf16.mxu0 0
    %127 = vmatpush1.bf16.msra.mxu0 0
    %128 = vmatprep.subr.bf16.mxu0 0
    %129 = vmatpush1.bf16.msra.mxu0 0
    %130 = vmatprep.subr.bf16.mxu0 0
    %131 = vmatpush1.bf16.msra.mxu0 0
    %132 = vmatprep.subr.bf16.mxu0 0
    %133 = vmatpush1.bf16.msra.mxu0 0
    %134 = vmatprep.mubr.bf16.mxu0 0
    %135 = vmatmul.mubr.bf16.gmra.mrb[0].mxu0 %v100
    %v136 = vpop.f32.mrb[0].mxu0
    %v137 = vadd.f32 %v85, %v136
    %v138 = vpop.f32.mrb[0].mxu0
    %v139 = vpop.f32.mrb[0].mxu0
    %v140 = vadd.f32 %v85, %v139
    %v141 = vpop.f32.mrb[0].mxu0
    %142 = vdwg.mxu0
    %v143 = vmul.f32 %v137, 0.5
    %v144 = vmul.f32 %v140, 0.5
    %v145 = vmul.f32 %v137, 0.70710677
    %v146 = vmul.f32 %v140, 0.70710677
    %v147 = verf.f32.pop %v145
    %v148 = verf.f32.pop %v146
    %v149 = vadd.f32 %v147, 1.0
    %v150 = vadd.f32 %v148, 1.0
    %v151 = vmul.f32 %v143, %v149
    %v152 = vmul.f32 %v144, %v150
    %v153 = vpack.c.bf16 %v152, %v151
    %v154 = vld [vmem:[%s5] sm:$0xf]
    %v155 = vld [vmem:[%s5 + $0x4] sm:$0xf]
    %v156 = vld [vmem:[%s5 + $0x8] sm:$0xf]
    %v157 = vld [vmem:[%s5 + $0xc] sm:$0xf]
    %v158 = vld [vmem:[%s5 + $0x10] sm:$0xf]
    %v159 = vld [vmem:[%s5 + $0x14] sm:$0xf]
    %v160 = vld [vmem:[%s5 + $0x18] sm:$0xf]
    %v161 = vld [vmem:[%s5 + $0x1c] sm:$0xf]
    %v162 = vld [vmem:[%s6] sm:$0x1]
    %v164 = vlaneseq
    %v165 = vshrl.u32 %v164, 7
    %v166 = vsub.s32 0, %v165
    %v167 = vrot.slane %v162, %v166
    %v177 = vunpack.c.l.b16 %v154
    %v178 = vunpack.c.l.b16 %v155
    %v179 = vunpack.c.l.b16 %v156
    %v180 = vunpack.c.l.b16 %v157
    %v181 = vunpack.c.l.b16 %v158
    %v182 = vunpack.c.l.b16 %v159
    %v183 = vunpack.c.l.b16 %v160
    %v184 = vunpack.c.l.b16 %v161
    %v185 = vpack.c.b16 %v178, %v177
    %v186 = vpack.c.b16 %v180, %v179
    %v187 = vpack.c.b16 %v182, %v181
    %v188 = vpack.c.b16 %v184, %v183
    %vm193 = vcmask 523264
    %v195 = vsel %vm193, %v153, 0
    %197 = vmatprep.subr.bf16.mxu0 0
    %198 = vmatpush1.bf16.msra.mxu0 %v185
    %199 = vmatprep.subr.bf16.mxu0 0
    %200 = vmatpush1.bf16.msra.mxu0 %v186
    %201 = vmatprep.subr.bf16.mxu0 0
    %202 = vmatpush1.bf16.msra.mxu0 %v187
    %203 = vmatprep.subr.bf16.mxu0 0
    %204 = vmatpush1.bf16.msra.mxu0 %v188
    %205 = vmatprep.subr.bf16.mxu0 0
    %206 = vmatpush1.bf16.msra.mxu0 0
    %207 = vmatprep.subr.bf16.mxu0 0
    %208 = vmatpush1.bf16.msra.mxu0 0
    %209 = vmatprep.subr.bf16.mxu0 0
    %210 = vmatpush1.bf16.msra.mxu0 0
    %211 = vmatprep.subr.bf16.mxu0 0
    %212 = vmatpush1.bf16.msra.mxu0 0
    %213 = vmatprep.subr.bf16.mxu0 0
    %214 = vmatpush1.bf16.msra.mxu0 0
    %215 = vmatprep.subr.bf16.mxu0 0
    %216 = vmatpush1.bf16.msra.mxu0 0
    %217 = vmatprep.subr.bf16.mxu0 0
    %218 = vmatpush1.bf16.msra.mxu0 0
    %219 = vmatprep.subr.bf16.mxu0 0
    %220 = vmatpush1.bf16.msra.mxu0 0
    %221 = vmatprep.subr.bf16.mxu0 0
    %222 = vmatpush1.bf16.msra.mxu0 0
    %223 = vmatprep.subr.bf16.mxu0 0
    %224 = vmatpush1.bf16.msra.mxu0 0
    %225 = vmatprep.subr.bf16.mxu0 0
    %226 = vmatpush1.bf16.msra.mxu0 0
    %227 = vmatprep.subr.bf16.mxu0 0
    %228 = vmatpush1.bf16.msra.mxu0 0
    %229 = vmatprep.mubr.bf16.mxu0 0
    %230 = vmatmul.mubr.bf16.gmra.mrb[0].mxu0 %v195
    %v231 = vpop.f32.mrb[0].mxu0
    %v232 = vadd.f32 %v167, %v231
    %v233 = vpop.f32.mrb[0].mxu0
    %v234 = vpop.f32.mrb[0].mxu0
    %v235 = vadd.f32 %v167, %v234
    %v236 = vpop.f32.mrb[0].mxu0
    %237 = vdwg.mxu0
    %vm238 = vcmask 130048
    %239 = vst.msk [vmem:[#allocation2] sm:$0xff] %vm238, %v232
    %240 = vst.msk [vmem:[#allocation2 + $0x8] sm:$0xff] %vm238, %v235
    // Predicated region
    $region30: #{mlp_decoder.1} parent=1 // pred_check
      _
    $region31: #{mlp_decoder.1} parent=1 // pred_check_branch
      %242 = sbr.rel (0) target = $region33
    $region32: #{mlp_decoder.1} parent=1 // pred_region
      %s244 = ssub.s32 256, 256
      %245 = vsyncadd [#allocation3], %s244
      %s246 = sshll.u32 [#allocation2], 4
      %s247 = int_to_ptr.vmem [resolvable:$true] %s246
      %252 = dma.vmem_to_hbm [thread:$0]  %s247, 256, %s7, [#allocation3], 128, 128, 8
    $region33: #{mlp_decoder.1} parent=1 // pred_fallthru
      _
    // Predicated region
    $region34: #{mlp_decoder.1} parent=1 // pred_check
      _
    $region35: #{mlp_decoder.1} parent=1 // pred_check_branch
      %254 = sbr.rel (0) target = $region37
    $region36: #{mlp_decoder.1} parent=1 // pred_region
      %255 = dma.done [#allocation3], 256
    $region37: #{mlp_decoder.1} parent=1 // pred_fallthru
      _
    %256 = vsyncpa [#allocation3], 1

// kernel: mlp_decoder.1
$region0: #{mlp_decoder.1}
  #allocation0 [shape = 'u32[]', space=smem, size = 0x4, offset = 0x4, fixed_abs, tag = 'smem constant byte address 0x4 - core index']
  #allocation1 [shape = 'u32[144,128]{1,0:T(1,128)}', space=vmem, size = 0x12000, scoped, tag = 'internal scratch']
  %s0 = inlined_call_operand.vmem [shape: f32[16,32], index: 0, kind: input, shape index: {}]
  %s1 = inlined_call_operand.vmem [shape: f32[1,32], index: 1, kind: input, shape index: {}]
  %s2 = inlined_call_operand.vmem [shape: f32[1,32], index: 2, kind: input, shape index: {}]
  %s3 = inlined_call_operand.vmem [shape: bf16[32,64], index: 3, kind: input, shape index: {}]
  %s4 = inlined_call_operand.vmem [shape: f32[1,64], index: 4, kind: input, shape index: {}]
  %s5 = inlined_call_operand.vmem [shape: bf16[64,16], index: 5, kind: input, shape index: {}]
  %s6 = inlined_call_operand.vmem [shape: f32[1,16], index: 6, kind: input, shape index: {}]
  %s7 = inlined_call_operand.hbm [shape: f32[16,16], index: 7, kind: output, shape index: {}]
  %s8 = sld [smem:[#allocation0]]
  $region38: #{mlp_decoder.1} parent=0
    _
  %s10 = ssub.s32 1, %s8
  %s11 = scalar_select 0, %s10, %s8
  $region1: #{mlp_decoder.1} parent=0
    #allocation2 [shape = 'u8[8192]{0}', space=vmem, size = 0x2000, scoped, tag = 'output window, operand 0, single buffered']
    #allocation3 [shape = 's32[1]{0}', space=sflag, size = 0x4, scoped, tag = 'scoped memory for mlp_decoder.1']
    %12 = vsyncpa [#allocation3], 0
    // Predicated region
    $region2: #{mlp_decoder.1} parent=1 // pred_check
      _
    $region3: #{mlp_decoder.1} parent=1 // pred_check_branch
      %14 = sbr.rel (0) target = $region5
    $region4: #{mlp_decoder.1} parent=1 // pred_region
      _
    $region5: #{mlp_decoder.1} parent=1 // pred_fallthru
      _
    // Predicated region
    $region6: #{mlp_decoder.1} parent=1 // pred_check
      _
    $region7: #{mlp_decoder.1} parent=1 // pred_check_branch
      %16 = sbr.rel (0) target = $region9
    $region8: #{mlp_decoder.1} parent=1 // pred_region
      _
    $region9: #{mlp_decoder.1} parent=1 // pred_fallthru
      _
    // Predicated region
    $region10: #{mlp_decoder.1} parent=1 // pred_check
      _
    $region11: #{mlp_decoder.1} parent=1 // pred_check_branch
      %18 = sbr.rel (0) target = $region13
    $region12: #{mlp_decoder.1} parent=1 // pred_region
      _
    $region13: #{mlp_decoder.1} parent=1 // pred_fallthru
      _
    // Predicated region
    $region14: #{mlp_decoder.1} parent=1 // pred_check
      _
    $region15: #{mlp_decoder.1} parent=1 // pred_check_branch
      %20 = sbr.rel (0) target = $region17
    $region16: #{mlp_decoder.1} parent=1 // pred_region
      _
    $region17: #{mlp_decoder.1} parent=1 // pred_fallthru
      _
    // Predicated region
    $region18: #{mlp_decoder.1} parent=1 // pred_check
      _
    $region19: #{mlp_decoder.1} parent=1 // pred_check_branch
      %22 = sbr.rel (0) target = $region21
    $region20: #{mlp_decoder.1} parent=1 // pred_region
      _
    $region21: #{mlp_decoder.1} parent=1 // pred_fallthru
      _
    // Predicated region
    $region22: #{mlp_decoder.1} parent=1 // pred_check
      _
    $region23: #{mlp_decoder.1} parent=1 // pred_check_branch
      %24 = sbr.rel (0) target = $region25
    $region24: #{mlp_decoder.1} parent=1 // pred_region
      _
    $region25: #{mlp_decoder.1} parent=1 // pred_fallthru
      _
    // Predicated region
    $region26: #{mlp_decoder.1} parent=1 // pred_check
      _
    $region27: #{mlp_decoder.1} parent=1 // pred_check_branch
      %26 = sbr.rel (0) target = $region29
    $region28: #{mlp_decoder.1} parent=1 // pred_region
      _
    $region29: #{mlp_decoder.1} parent=1 // pred_fallthru
      _
    %v28 = vld [vmem:[%s0] sm:$0xff]
    %v29 = vld [vmem:[%s0 + $0x8] sm:$0xff]
    %vm30 = vcmask 261120
    %v31 = vsel %vm30, %v28, 0.0
    %32 = vadd.xlane.f32.xlu0 %v31
    %v33 = vpop.xlane.xlu0 %32
    %v34 = vsel %vm30, %v29, 0.0
    %35 = vadd.xlane.f32.xlu0 %v34
    %v36 = vpop.xlane.xlu0 %35
    %v37 = vmul.f32 %v33, 0.03125
    %v38 = vmul.f32 %v36, 0.03125
    %v39 = vsub.f32 %v28, %v37
    %v40 = vsub.f32 %v29, %v38
    %v41 = vmul.f32 %v39, %v39
    %v42 = vmul.f32 %v40, %v40
    %v43 = vsel %vm30, %v41, 0.0
    %44 = vadd.xlane.f32.xlu0 %v43
    %v45 = vpop.xlane.xlu0 %44
    %v46 = vsel %vm30, %v42, 0.0
    %47 = vadd.xlane.f32.xlu0 %v46
    %v48 = vpop.xlane.xlu0 %47
    %v49 = vmul.f32 %v45, 0.03125
    %v50 = vmul.f32 %v48, 0.03125
    %v51 = vadd.f32 %v49, 1e-05
    %v52 = vadd.f32 %v50, 1e-05
    %v53 = vrsqrt.pop %v51
    %v54 = vrsqrt.pop %v52
    %v55 = vmul.f32 %v39, %v53
    %v56 = vmul.f32 %v40, %v54
    %v57 = vld [vmem:[%s1] sm:$0x1]
    %v59 = vlaneseq
    %v60 = vshrl.u32 %v59, 7
    %v61 = vsub.s32 0, %v60
    %v62 = vrot.slane %v57, %v61
    %v64 = vmul.f32 %v55, %v62
    %v65 = vmul.f32 %v56, %v62
    %v66 = vld [vmem:[%s2] sm:$0x1]
    %v68 = vlaneseq
    %v69 = vshrl.u32 %v68, 7
    %v70 = vsub.s32 0, %v69
    %v71 = vrot.slane %v66, %v70
    %v73 = vadd.f32 %v64, %v71
    %v74 = vadd.f32 %v65, %v71
    %v75 = vpack.c.bf16 %v74, %v73
    %v76 = vld [vmem:[%s3] sm:$0xf]
    %v77 = vld [vmem:[%s3 + $0x4] sm:$0xf]
    %v78 = vld [vmem:[%s3 + $0x8] sm:$0xf]
    %v79 = vld [vmem:[%s3 + $0xc] sm:$0xf]
    %v80 = vld [vmem:[%s4] sm:$0x1]
    %v82 = vlaneseq
    %v83 = vshrl.u32 %v82, 7
    %v84 = vsub.s32 0, %v83
    %v85 = vrot.slane %v80, %v84
    %v91 = vunpack.c.l.b16 %v76
    %v92 = vunpack.c.l.b16 %v77
    %v93 = vunpack.c.l.b16 %v78
    %v94 = vunpack.c.l.b16 %v79
    %v95 = vpack.c.b16 %v92, %v91
    %v96 = vpack.c.b16 %v94, %v93
    %v100 = vsel %vm30, %v75, 0
    %102 = vmatprep.subr.bf16.mxu0 0
    %103 = vmatpush1.bf16.msra.mxu0 %v95
    %104 = vmatprep.subr.bf16.mxu0 0
    %105 = vmatpush1.bf16.msra.mxu0 %v96
    %106 = vmatprep.subr.bf16.mxu0 0
    %107 = vmatpush1.bf16.msra.mxu0 0
    %108 = vmatprep.subr.bf16.mxu0 0
    %109 = vmatpush1.bf16.msra.mxu0 0
    %110 = vmatprep.subr.bf16.mxu0 0
    %111 = vmatpush1.bf16.msra.mxu0 0
    %112 = vmatprep.subr.bf16.mxu0 0
    %113 = vmatpush1.bf16.msra.mxu0 0
    %114 = vmatprep.subr.bf16.mxu0 0
    %115 = vmatpush1.bf16.msra.mxu0 0
    %116 = vmatprep.subr.bf16.mxu0 0
    %117 = vmatpush1.bf16.msra.mxu0 0
    %118 = vmatprep.subr.bf16.mxu0 0
    %119 = vmatpush1.bf16.msra.mxu0 0
    %120 = vmatprep.subr.bf16.mxu0 0
    %121 = vmatpush1.bf16.msra.mxu0 0
    %122 = vmatprep.subr.bf16.mxu0 0
    %123 = vmatpush1.bf16.msra.mxu0 0
    %124 = vmatprep.subr.bf16.mxu0 0
    %125 = vmatpush1.bf16.msra.mxu0 0
    %126 = vmatprep.subr.bf16.mxu0 0
    %127 = vmatpush1.bf16.msra.mxu0 0
    %128 = vmatprep.subr.bf16.mxu0 0
    %129 = vmatpush1.bf16.msra.mxu0 0
    %130 = vmatprep.subr.bf16.mxu0 0
    %131 = vmatpush1.bf16.msra.mxu0 0
    %132 = vmatprep.subr.bf16.mxu0 0
    %133 = vmatpush1.bf16.msra.mxu0 0
    %134 = vmatprep.mubr.bf16.mxu0 0
    %135 = vmatmul.mubr.bf16.gmra.mrb[0].mxu0 %v100
    %v136 = vpop.f32.mrb[0].mxu0
    %v137 = vadd.f32 %v85, %v136
    %v138 = vpop.f32.mrb[0].mxu0
    %v139 = vpop.f32.mrb[0].mxu0
    %v140 = vadd.f32 %v85, %v139
    %v141 = vpop.f32.mrb[0].mxu0
    %142 = vdwg.mxu0
    %v143 = vmul.f32 %v137, 0.5
    %v144 = vmul.f32 %v140, 0.5
    %v145 = vmul.f32 %v137, 0.70710677
    %v146 = vmul.f32 %v140, 0.70710677
    %v147 = verf.f32.pop %v145
    %v148 = verf.f32.pop %v146
    %v149 = vadd.f32 %v147, 1.0
    %v150 = vadd.f32 %v148, 1.0
    %v151 = vmul.f32 %v143, %v149
    %v152 = vmul.f32 %v144, %v150
    %v153 = vpack.c.bf16 %v152, %v151
    %v154 = vld [vmem:[%s5] sm:$0xf]
    %v155 = vld [vmem:[%s5 + $0x4] sm:$0xf]
    %v156 = vld [vmem:[%s5 + $0x8] sm:$0xf]
    %v157 = vld [vmem:[%s5 + $0xc] sm:$0xf]
    %v158 = vld [vmem:[%s5 + $0x10] sm:$0xf]
    %v159 = vld [vmem:[%s5 + $0x14] sm:$0xf]
    %v160 = vld [vmem:[%s5 + $0x18] sm:$0xf]
    %v161 = vld [vmem:[%s5 + $0x1c] sm:$0xf]
    %v162 = vld [vmem:[%s6] sm:$0x1]
    %v164 = vlaneseq
    %v165 = vshrl.u32 %v164, 7
    %v166 = vsub.s32 0, %v165
    %v167 = vrot.slane %v162, %v166
    %v177 = vunpack.c.l.b16 %v154
    %v178 = vunpack.c.l.b16 %v155
    %v179 = vunpack.c.l.b16 %v156
    %v180 = vunpack.c.l.b16 %v157
    %v181 = vunpack.c.l.b16 %v158
    %v182 = vunpack.c.l.b16 %v159
    %v183 = vunpack.c.l.b16 %v160
    %v184 = vunpack.c.l.b16 %v161
    %v185 = vpack.c.b16 %v178, %v177
    %v186 = vpack.c.b16 %v180, %v179
    %v187 = vpack.c.b16 %v182, %v181
    %v188 = vpack.c.b16 %v184, %v183
    %vm193 = vcmask 523264
    %v195 = vsel %vm193, %v153, 0
    %197 = vmatprep.subr.bf16.mxu0 0
    %198 = vmatpush1.bf16.msra.mxu0 %v185
    %199 = vmatprep.subr.bf16.mxu0 0
    %200 = vmatpush1.bf16.msra.mxu0 %v186
    %201 = vmatprep.subr.bf16.mxu0 0
    %202 = vmatpush1.bf16.msra.mxu0 %v187
    %203 = vmatprep.subr.bf16.mxu0 0
    %204 = vmatpush1.bf16.msra.mxu0 %v188
    %205 = vmatprep.subr.bf16.mxu0 0
    %206 = vmatpush1.bf16.msra.mxu0 0
    %207 = vmatprep.subr.bf16.mxu0 0
    %208 = vmatpush1.bf16.msra.mxu0 0
    %209 = vmatprep.subr.bf16.mxu0 0
    %210 = vmatpush1.bf16.msra.mxu0 0
    %211 = vmatprep.subr.bf16.mxu0 0
    %212 = vmatpush1.bf16.msra.mxu0 0
    %213 = vmatprep.subr.bf16.mxu0 0
    %214 = vmatpush1.bf16.msra.mxu0 0
    %215 = vmatprep.subr.bf16.mxu0 0
    %216 = vmatpush1.bf16.msra.mxu0 0
    %217 = vmatprep.subr.bf16.mxu0 0
    %218 = vmatpush1.bf16.msra.mxu0 0
    %219 = vmatprep.subr.bf16.mxu0 0
    %220 = vmatpush1.bf16.msra.mxu0 0
    %221 = vmatprep.subr.bf16.mxu0 0
    %222 = vmatpush1.bf16.msra.mxu0 0
    %223 = vmatprep.subr.bf16.mxu0 0
    %224 = vmatpush1.bf16.msra.mxu0 0
    %225 = vmatprep.subr.bf16.mxu0 0
    %226 = vmatpush1.bf16.msra.mxu0 0
    %227 = vmatprep.subr.bf16.mxu0 0
    %228 = vmatpush1.bf16.msra.mxu0 0
    %229 = vmatprep.mubr.bf16.mxu0 0
    %230 = vmatmul.mubr.bf16.gmra.mrb[0].mxu0 %v195
    %v231 = vpop.f32.mrb[0].mxu0
    %v232 = vadd.f32 %v167, %v231
    %v233 = vpop.f32.mrb[0].mxu0
    %v234 = vpop.f32.mrb[0].mxu0
    %v235 = vadd.f32 %v167, %v234
    %v236 = vpop.f32.mrb[0].mxu0
    %237 = vdwg.mxu0
    %vm238 = vcmask 130048
    %239 = vst.msk [vmem:[#allocation2] sm:$0xff] %vm238, %v232
    %240 = vst.msk [vmem:[#allocation2 + $0x8] sm:$0xff] %vm238, %v235
    // Predicated region
    $region30: #{mlp_decoder.1} parent=1 // pred_check
      _
    $region31: #{mlp_decoder.1} parent=1 // pred_check_branch
      %242 = sbr.rel (0) target = $region33
    $region32: #{mlp_decoder.1} parent=1 // pred_region
      %s244 = ssub.s32 256, 256
      %245 = vsyncadd [#allocation3], %s244
      %s246 = sshll.u32 [#allocation2], 4
      %s247 = int_to_ptr.vmem [resolvable:$true] %s246
      %252 = dma.vmem_to_hbm [thread:$0]  %s247, 256, %s7, [#allocation3], 128, 128, 8
    $region33: #{mlp_decoder.1} parent=1 // pred_fallthru
      _
    // Predicated region
    $region34: #{mlp_decoder.1} parent=1 // pred_check
      _
    $region35: #{mlp_decoder.1} parent=1 // pred_check_branch
      %254 = sbr.rel (0) target = $region37
    $region36: #{mlp_decoder.1} parent=1 // pred_region
      %255 = dma.done [#allocation3], 256
    $region37: #{mlp_decoder.1} parent=1 // pred_fallthru
      _
    %256 = vsyncpa [#allocation3], 1

</llo_original>
